<compile_context>
chip_gen: v7x
topology: tpu7x:2x2x1
jax: 0.10.0
libtpu: 0.0.40
codegen_flags: <defaults>
</compile_context>

<pallas_src>
import jax
import jax.numpy as jnp
from jax.experimental import pallas as pl
from jax.experimental.pallas import tpu as pltpu

EPS = 1e-5
LANE = 128
BLOCK_BUDGET_BYTES = 4 * 1024 * 1024         # per-input-block target
VMEM_LIMIT_BYTES = 40 * 1024 * 1024          # scoped VMEM limit (fits v7x 64 MiB)
FAST_PATH_MAX_F32_BYTES = 4 * 1024 * 1024    # whole-tensor fused path threshold
MAX_UNROLL_CHUNKS = 32                       # lane-preserving accumulation unroll cap


# ----------------------------------------------------------------------------- 
# Fast path: single fused kernel (stats + apply), two-pass variance.
# -----------------------------------------------------------------------------
def _make_fused_kernel(total_count, pad_count):
    inv_m = 1.0 / float(total_count)

    def kernel(x_ref, gamma_ref, beta_ref, o_ref):
        x = x_ref[...].astype(jnp.float32)                          # (N, C, HWp)
        s1 = jnp.sum(jnp.sum(x, axis=2, keepdims=True), axis=0, keepdims=True)
        mean = s1 * inv_m                                           # (1, C, 1)
        d = x - mean
        ss = jnp.sum(jnp.sum(d * d, axis=2, keepdims=True), axis=0, keepdims=True)
        if pad_count:
            # Zero-padded lanes contributed (0 - mean)^2 each; remove exactly.
            ss = ss - float(pad_count) * mean * mean
        var = jnp.maximum(ss * inv_m, 0.0)
        scale = gamma_ref[...] * jax.lax.rsqrt(var + EPS)           # (1, C, 1)
        shift = beta_ref[...] - mean * scale
        o_ref[...] = (x * scale + shift).astype(o_ref.dtype)

    return kernel


# -----------------------------------------------------------------------------
# Streaming path, pass 1: per-N partial (sum, sum-of-squares).
# -----------------------------------------------------------------------------
def _make_stats_kernel(n_chunks):
    lane_preserving = n_chunks <= MAX_UNROLL_CHUNKS

    def kernel(x_ref, s1_ref, s2_ref, s1_acc, s2_acc):
        t = pl.program_id(1)

        @pl.when(t == 0)
        def _init():
            s1_acc[...] = jnp.zeros_like(s1_acc)
            s2_acc[...] = jnp.zeros_like(s2_acc)

        x = x_ref[0].astype(jnp.float32)                            # (C, hw_tile)

        if lane_preserving:
            # Pure VPU adds of 128-lane chunks into a (C, 128) accumulator; the
            # cross-lane (XLU) reduce is deferred to the once-per-N finalize.
            c0 = x[:, 0:LANE]
            p1 = c0
            p2 = c0 * c0
            for j in range(1, n_chunks):
                cj = x[:, j * LANE:(j + 1) * LANE]
                p1 = p1 + cj
                p2 = p2 + cj * cj
            s1_acc[...] += p1
            s2_acc[...] += p2
        else:
            # Small-C / huge-tile regime: the per-block reduce is dominated by
            # VPU adds and HBM traffic; keep it vectorized.
            s1_acc[...] += jnp.sum(x, axis=1, keepdims=True)
            s2_acc[...] += jnp.sum(x * x, axis=1, keepdims=True)

        @pl.when(t == pl.num_programs(1) - 1)
        def _finalize():
            if lane_preserving:
                s1_ref[0] = jnp.sum(s1_acc[...], axis=1, keepdims=True)
                s2_ref[0] = jnp.sum(s2_acc[...], axis=1, keepdims=True)
            else:
                s1_ref[0] = s1_acc[...]
                s2_ref[0] = s2_acc[...]

    acc_lanes = LANE if lane_preserving else 1
    return kernel, acc_lanes


# -----------------------------------------------------------------------------
# Streaming path, pass 2: o = x * scale + shift (f32 math, cast on store).
# -----------------------------------------------------------------------------
def _apply_kernel(x_ref, scale_ref, shift_ref, o_ref):
    x = x_ref[0].astype(jnp.float32)                                # (C, hw_tile)
    o_ref[0] = (x * scale_ref[...] + shift_ref[...]).astype(o_ref.dtype)


def _pick_hw_tile(hw_padded, channels, itemsize):
    """Largest multiple-of-128 divisor of hw_padded whose block fits the budget."""
    best = LANE
    for t in range(LANE, hw_padded + 1, LANE):
        if hw_padded % t == 0 and channels * t * itemsize <= BLOCK_BUDGET_BYTES:
            best = t
    return best


def cond_batch_norm_2d(x, cond, gammas, betas, *, use_fused=None):
    """x: (N, C, H, W); cond: int in [0, num_conds); gammas/betas: (num_conds, C)."""
    N, C, H, W = x.shape
    HW = H * W
    HWp = ((HW + LANE - 1) // LANE) * LANE
    M = N * HW

    # Conditional affine parameters: tiny XLA gather of the selected set.
    cond_idx = jnp.asarray(cond, dtype=jnp.int32)
    g = jax.lax.dynamic_index_in_dim(gammas, cond_idx, 0, keepdims=False).astype(jnp.float32)
    b = jax.lax.dynamic_index_in_dim(betas, cond_idx, 0, keepdims=False).astype(jnp.float32)

    # Contiguous reshape; zero-pad spatial extent to a lane-dense multiple of 128.
    x3 = x.reshape(N, C, HW)
    if HWp != HW:
        x3 = jnp.pad(x3, ((0, 0), (0, 0), (0, HWp - HW)))

    if use_fused is None:
        use_fused = (N * C * HWp * 4) <= FAST_PATH_MAX_F32_BYTES

    if use_fused:
        # ---- single fused call: read x once, stats + apply in one body ------
        out3 = pl.pallas_call(
            _make_fused_kernel(M, N * (HWp - HW)),
            out_shape=jax.ShapeDtypeStruct((N, C, HWp), x.dtype),
            compiler_params=pltpu.CompilerParams(
                vmem_limit_bytes=VMEM_LIMIT_BYTES),
        )(x3, g.reshape(1, C, 1), b.reshape(1, C, 1))
    else:
        hw_tile = _pick_hw_tile(HWp, C, x.dtype.itemsize)
        n_hw = HWp // hw_tile
        stats_kernel, acc_lanes = _make_stats_kernel(hw_tile // LANE)

        # ---- pass 1: per-N partial (sum, sumsq); N axis megacore-parallel ---
        s1p, s2p = pl.pallas_call(
            stats_kernel,
            out_shape=(jax.ShapeDtypeStruct((N, C, 1), jnp.float32),
                       jax.ShapeDtypeStruct((N, C, 1), jnp.float32)),
            grid_spec=pltpu.PrefetchScalarGridSpec(
                num_scalar_prefetch=0,
                grid=(N, n_hw),
                in_specs=[pl.BlockSpec((1, C, hw_tile), lambda n, t: (n, 0, t))],
                out_specs=[pl.BlockSpec((1, C, 1), lambda n, t: (n, 0, 0)),
                           pl.BlockSpec((1, C, 1), lambda n, t: (n, 0, 0))],
                scratch_shapes=[pltpu.VMEM((C, acc_lanes), jnp.float32),
                                pltpu.VMEM((C, acc_lanes), jnp.float32)],
            ),
            compiler_params=pltpu.CompilerParams(
                dimension_semantics=("parallel", "arbitrary"),
                vmem_limit_bytes=VMEM_LIMIT_BYTES),
        )(x3)

        # ---- tiny cross-N combine + fused scale/shift in plain XLA ----------
        inv_m = 1.0 / float(M)
        mean = jnp.sum(s1p, axis=0) * inv_m                          # (C, 1)
        var = jnp.maximum(jnp.sum(s2p, axis=0) * inv_m - mean * mean, 0.0)
        scale = g.reshape(C, 1) * jax.lax.rsqrt(var + EPS)           # (C, 1)
        shift = b.reshape(C, 1) - mean * scale

        # ---- pass 2: apply (embarrassingly parallel) -------------------------
        out3 = pl.pallas_call(
            _apply_kernel,
            out_shape=jax.ShapeDtypeStruct((N, C, HWp), x.dtype),
            grid_spec=pltpu.PrefetchScalarGridSpec(
                num_scalar_prefetch=0,
                grid=(N, n_hw),
                in_specs=[
                    pl.BlockSpec((1, C, hw_tile), lambda n, t: (n, 0, t)),
                    pl.BlockSpec((C, 1), lambda n, t: (0, 0)),
                    pl.BlockSpec((C, 1), lambda n, t: (0, 0)),
                ],
                out_specs=pl.BlockSpec((1, C, hw_tile), lambda n, t: (n, 0, t)),
            ),
            compiler_params=pltpu.CompilerParams(
                dimension_semantics=("parallel", "parallel"),
                vmem_limit_bytes=VMEM_LIMIT_BYTES),
        )(x3, scale, shift)

    if HWp != HW:
        out3 = out3[:, :, :HW]
    return out3.reshape(N, C, H, W)


def _reference(x, cond, gammas, betas):
    """Pure-JAX reference matching torch.nn.BatchNorm2d in training mode."""
    mean = jnp.mean(x, axis=(0, 2, 3), keepdims=True)
    var = jnp.mean((x - mean) ** 2, axis=(0, 2, 3), keepdims=True)
    g = gammas[cond].reshape(1, -1, 1, 1)
    b = betas[cond].reshape(1, -1, 1, 1)
    return (x - mean) * jax.lax.rsqrt(var + EPS) * g + b


if __name__ == "__main__":
    # Module config: num_features=4, num_conds=2.
    NUM_CONDS = 2
    C = 4

    key = jax.random.PRNGKey(0)
    kx, kg, kb = jax.random.split(key, 3)

    # PyTorch default is gamma=1, beta=0 for every cond; perturb so the
    # condition selection is observable.
    gammas = 1.0 + 0.1 * jax.random.normal(kg, (NUM_CONDS, C), jnp.float32)
    betas = 0.1 * jax.random.normal(kb, (NUM_CONDS, C), jnp.float32)

    x16 = jax.random.normal(kx, (2, C, 16, 16), jnp.float32)
    x9 = jax.random.normal(jax.random.fold_in(kx, 1), (2, C, 9, 9), jnp.float32)

    cases = [
        ("fused f32 16x16", x16, 0, None, 1e-5, 1e-5),
        ("fused f32 16x16", x16, 1, None, 1e-5, 1e-5),
        ("fused f32 9x9 padded", x9, 1, None, 1e-5, 1e-5),
        ("two-pass f32 16x16", x16, 0, False, 1e-5, 1e-5),
        ("two-pass f32 9x9 padded", x9, 1, False, 1e-5, 1e-5),
        ("fused bf16 16x16", x16.astype(jnp.bfloat16), 0, None, 2e-2, 2e-2),
    ]

    ok = True
    for tag, xx, cond, use_fused, atol, rtol in cases:
        out = cond_batch_norm_2d(xx, cond, gammas, betas, use_fused=use_fused)
        out = jax.block_until_ready(out)
        ref = _reference(xx.astype(jnp.float32), cond, gammas, betas)
        if not jnp.allclose(out.astype(jnp.float32), ref, atol=atol, rtol=rtol):
            ok = False
            err = jnp.max(jnp.abs(out.astype(jnp.float32) - ref))
            print(f"MISMATCH [{tag}] cond={cond}: max abs err {err}")

    if ok:
        print("KERNEL_OK")
</pallas_src>

<mosaic_0001>
module attributes {stable_mosaic.version = 11 : i64} {
  func.func @kernel(%arg0: memref<2x4x256xf32, #tpu.memory_space<vmem>>, %arg1: memref<1x4x1xf32, #tpu.memory_space<vmem>>, %arg2: memref<1x4x1xf32, #tpu.memory_space<vmem>>, %arg3: memref<2x4x256xf32, #tpu.memory_space<vmem>>) attributes {dimension_semantics = [], scalar_prefetch = 0 : i64, scratch_operands = 0 : i64, tpu.core_type = #tpu.core_type<tc>} {
    %c0 = arith.constant 0 : index
    %c0_0 = arith.constant 0 : index
    %c0_1 = arith.constant 0 : index
    %0 = vector.load %arg0[%c0, %c0_0, %c0_1] : memref<2x4x256xf32, #tpu.memory_space<vmem>>, vector<2x4x256xf32>
    %cst = arith.constant dense<0.000000e+00> : vector<2x4xf32>
    %1 = vector.multi_reduction <add>, %0, %cst [2] : vector<2x4x256xf32> to vector<2x4xf32>
    %2 = vector.shape_cast %1 : vector<2x4xf32> to vector<2x4x1xf32>
    %cst_2 = arith.constant dense<0.000000e+00> : vector<4x1xf32>
    %3 = vector.multi_reduction <add>, %2, %cst_2 [0] : vector<2x4x1xf32> to vector<4x1xf32>
    %4 = vector.shape_cast %3 : vector<4x1xf32> to vector<1x4x1xf32>
    %cst_3 = arith.constant 0.001953125 : f32
    %5 = vector.broadcast %cst_3 : f32 to vector<1x4x1xf32>
    %6 = arith.mulf %4, %5 : vector<1x4x1xf32>
    %7 = vector.broadcast %6 : vector<1x4x1xf32> to vector<2x4x256xf32>
    %8 = arith.subf %0, %7 : vector<2x4x256xf32>
    %9 = arith.mulf %8, %8 : vector<2x4x256xf32>
    %cst_4 = arith.constant dense<0.000000e+00> : vector<2x4xf32>
    %10 = vector.multi_reduction <add>, %9, %cst_4 [2] : vector<2x4x256xf32> to vector<2x4xf32>
    %11 = vector.shape_cast %10 : vector<2x4xf32> to vector<2x4x1xf32>
    %cst_5 = arith.constant dense<0.000000e+00> : vector<4x1xf32>
    %12 = vector.multi_reduction <add>, %11, %cst_5 [0] : vector<2x4x1xf32> to vector<4x1xf32>
    %13 = vector.shape_cast %12 : vector<4x1xf32> to vector<1x4x1xf32>
    %cst_6 = arith.constant 0.001953125 : f32
    %14 = vector.broadcast %cst_6 : f32 to vector<1x4x1xf32>
    %15 = arith.mulf %13, %14 : vector<1x4x1xf32>
    %cst_7 = arith.constant 0.000000e+00 : f32
    %16 = vector.broadcast %cst_7 : f32 to vector<1x4x1xf32>
    %17 = arith.maximumf %15, %16 : vector<1x4x1xf32>
    %c0_8 = arith.constant 0 : index
    %c0_9 = arith.constant 0 : index
    %c0_10 = arith.constant 0 : index
    %18 = vector.load %arg1[%c0_8, %c0_9, %c0_10] : memref<1x4x1xf32, #tpu.memory_space<vmem>>, vector<1x4x1xf32>
    %cst_11 = arith.constant 9.99999974E-6 : f32
    %19 = vector.broadcast %cst_11 : f32 to vector<1x4x1xf32>
    %20 = arith.addf %17, %19 : vector<1x4x1xf32>
    %21 = math.rsqrt %20 : vector<1x4x1xf32>
    %22 = arith.mulf %18, %21 : vector<1x4x1xf32>
    %c0_12 = arith.constant 0 : index
    %c0_13 = arith.constant 0 : index
    %c0_14 = arith.constant 0 : index
    %23 = vector.load %arg2[%c0_12, %c0_13, %c0_14] : memref<1x4x1xf32, #tpu.memory_space<vmem>>, vector<1x4x1xf32>
    %24 = arith.mulf %6, %22 : vector<1x4x1xf32>
    %25 = arith.subf %23, %24 : vector<1x4x1xf32>
    %26 = vector.broadcast %22 : vector<1x4x1xf32> to vector<2x4x256xf32>
    %27 = arith.mulf %0, %26 : vector<2x4x256xf32>
    %28 = vector.broadcast %25 : vector<1x4x1xf32> to vector<2x4x256xf32>
    %29 = arith.addf %27, %28 : vector<2x4x256xf32>
    %c0_15 = arith.constant 0 : index
    %c0_16 = arith.constant 0 : index
    %c0_17 = arith.constant 0 : index
    %30 = vector.load %arg3[%c0_15, %c0_16, %c0_17] : memref<2x4x256xf32, #tpu.memory_space<vmem>>, vector<2x4x256xf32>
    tpu.vector_store %arg3[%c0_15, %c0_16, %c0_17], %29 {strides = array<i32>} : memref<2x4x256xf32, #tpu.memory_space<vmem>>, vector<2x4x256xf32>,
    return
  }
}

</mosaic_0001>

<llo_original>
// kernel: tpu_custom_call.1
$region0: #{tpu_custom_call.1}
  #allocation0 [shape = 'u32[]', space=smem, size = 0x4, offset = 0x4, fixed_abs, tag = 'smem constant byte address 0x4 - core index']
  #allocation1 [shape = 'u32[144,128]{1,0:T(1,128)}', space=vmem, size = 0x12000, scoped, tag = 'internal scratch']
  %s0 = inlined_call_operand.hbm [shape: f32[2,4,256], index: 0, kind: input, shape index: {}]
  %s1 = inlined_call_operand.vmem [shape: f32[1,4,1], index: 1, kind: input, shape index: {}]
  %s2 = inlined_call_operand.vmem [shape: f32[1,4,1], index: 2, kind: input, shape index: {}]
  %s3 = inlined_call_operand.hbm [shape: f32[2,4,256], index: 3, kind: output, shape index: {}]
  %s4 = sld [smem:[#allocation0]]
  $region26: #{tpu_custom_call.1} parent=0
    _
  %s6 = ssub.s32 1, %s4
  %s7 = scalar_select 0, %s6, %s4
  $region1: #{tpu_custom_call.1} parent=0
    #allocation2 [shape = 'u8[8192]{0}', space=vmem, size = 0x2000, scoped, tag = 'input window, operand 0, single buffered']
    #allocation3 [shape = 's32[1]{0}', space=sflag, size = 0x4, scoped, tag = 'scoped memory for tpu_custom_call.1']
    #allocation4 [shape = 's32[1]{0}', space=sflag, size = 0x4, scoped, tag = 'scoped memory for tpu_custom_call.1']
    #allocation5 [shape = 'u8[8192]{0}', space=vmem, size = 0x2000, scoped, tag = 'output window, operand 0, single buffered']
    %8 = vsyncpa [#allocation3], 0
    %9 = vsyncpa [#allocation4], 0
    // Predicated region
    $region2: #{tpu_custom_call.1} parent=1 // pred_check
      _
    $region3: #{tpu_custom_call.1} parent=1 // pred_check_branch
      %11 = sbr.rel (0) target = $region5
    $region4: #{tpu_custom_call.1} parent=1 // pred_region
      %s13 = ssub.s32 256, 256
      %14 = vsyncadd [#allocation3], %s13
      %s15 = sshll.u32 [#allocation2], 4
      %s16 = int_to_ptr.vmem [resolvable:$true] %s15
      %21 = dma.hbm_to_vmem [thread:$0]  %s0, 256, %s16, [#allocation3], 128, 128, 8
    $region5: #{tpu_custom_call.1} parent=1 // pred_fallthru
      _
    // Predicated region
    $region6: #{tpu_custom_call.1} parent=1 // pred_check
      _
    $region7: #{tpu_custom_call.1} parent=1 // pred_check_branch
      %23 = sbr.rel (0) target = $region9
    $region8: #{tpu_custom_call.1} parent=1 // pred_region
      _
    $region9: #{tpu_custom_call.1} parent=1 // pred_fallthru
      _
    // Predicated region
    $region10: #{tpu_custom_call.1} parent=1 // pred_check
      _
    $region11: #{tpu_custom_call.1} parent=1 // pred_check_branch
      %25 = sbr.rel (0) target = $region13
    $region12: #{tpu_custom_call.1} parent=1 // pred_region
      _
    $region13: #{tpu_custom_call.1} parent=1 // pred_fallthru
      _
    // Predicated region
    $region14: #{tpu_custom_call.1} parent=1 // pred_check
      _
    $region15: #{tpu_custom_call.1} parent=1 // pred_check_branch
      %27 = sbr.rel (0) target = $region17
    $region16: #{tpu_custom_call.1} parent=1 // pred_region
      %28 = dma.done [#allocation3], 256
    $region17: #{tpu_custom_call.1} parent=1 // pred_fallthru
      _
    %v29 = vld [vmem:[#allocation2] sm:$0xff]
    %v30 = vld [vmem:[#allocation2 + $0x8] sm:$0xff]
    %v33 = vcombine.high %v29, %v29
    %v34 = vcombine.high %v30, %v30
    %vm37 = vcmask 1043456
    %v38 = vsel %vm37, %v29, 0.0
    %v39 = vsel %vm37, %v33, 0.0
    %v40 = vadd.f32 %v38, %v39
    %41 = vadd.xlane.f32.xlu0 %v40
    %v42 = vpop.xlane.xlu0 %41
    %v43 = vsel %vm37, %v30, 0.0
    %v44 = vsel %vm37, %v34, 0.0
    %v45 = vadd.f32 %v43, %v44
    %46 = vadd.xlane.f32.xlu0 %v45
    %v47 = vpop.xlane.xlu0 %46
    %v48 = vsel %vm37, %v42, 0.0
    %v49 = vsel %vm37, %v47, 0.0
    %v50 = vadd.f32 %v48, %v49
    %v51 = vmul.f32 %v50, 0.001953125
    %v54 = vunpack.c.l.s4 839922192
    %v55 = vunpack.c.0.s8 %v54
    %v56 = vlaneseq
    %v57 = vshrl.u32 %v56, 7
    %v58 = vsub.s32 %v55, %v57
    %v59 = vrot.slane %v51, %v58
    %v61 = vsub.f32 %v29, %v59
    %v62 = vsub.f32 %v30, %v59
    %v63 = vmul.f32 %v61, %v61
    %v64 = vmul.f32 %v62, %v62
    %v67 = vcombine.high %v63, %v63
    %v68 = vcombine.high %v64, %v64
    %v71 = vsel %vm37, %v63, 0.0
    %v72 = vsel %vm37, %v67, 0.0
    %v73 = vadd.f32 %v71, %v72
    %74 = vadd.xlane.f32.xlu0 %v73
    %v75 = vpop.xlane.xlu0 %74
    %v76 = vsel %vm37, %v64, 0.0
    %v77 = vsel %vm37, %v68, 0.0
    %v78 = vadd.f32 %v76, %v77
    %79 = vadd.xlane.f32.xlu0 %v78
    %v80 = vpop.xlane.xlu0 %79
    %v81 = vsel %vm37, %v75, 0.0
    %v82 = vsel %vm37, %v80, 0.0
    %v83 = vadd.f32 %v81, %v82
    %v84 = vmul.f32 %v83, 0.001953125
    %v85 = vmax.f32 %v84, 0.0
    %v86 = vld [vmem:[%s1] sm:$0xf]
    %v87 = vadd.f32 %v85, 1e-05
    %v88 = vrsqrt.pop %v87
    %v89 = vmul.f32 %v86, %v88
    %v90 = vld [vmem:[%s2] sm:$0xf]
    %v91 = vmul.f32 %v51, %v89
    %v92 = vsub.f32 %v90, %v91
    %94 = vset.pattern.permute.xlu0 0
    %95 = vperm.xlu0 %94, %v89
    %v96 = vpop.permute.xlu0 %95
    %v98 = vunpack.c.l.s4 839922192
    %v99 = vunpack.c.0.s8 %v98
    %v100 = vlaneseq
    %v101 = vshrl.u32 %v100, 7
    %v102 = vsub.s32 %v99, %v101
    %v103 = vrot.slane %v96, %v102
    %v105 = vmul.f32 %v29, %v103
    %v106 = vmul.f32 %v30, %v103
    %108 = vset.pattern.permute.xlu0 0
    %109 = vperm.xlu0 %108, %v92
    %v110 = vpop.permute.xlu0 %109
    %v112 = vunpack.c.l.s4 839922192
    %v113 = vunpack.c.0.s8 %v112
    %v114 = vlaneseq
    %v115 = vshrl.u32 %v114, 7
    %v116 = vsub.s32 %v113, %v115
    %v117 = vrot.slane %v110, %v116
    %v119 = vadd.f32 %v105, %v117
    %v120 = vadd.f32 %v106, %v117
    %121 = vst [vmem:[#allocation5] sm:$0xff] %v119
    %122 = vst [vmem:[#allocation5 + $0x8] sm:$0xff] %v120
    // Predicated region
    $region18: #{tpu_custom_call.1} parent=1 // pred_check
      _
    $region19: #{tpu_custom_call.1} parent=1 // pred_check_branch
      %124 = sbr.rel (0) target = $region21
    $region20: #{tpu_custom_call.1} parent=1 // pred_region
      %s126 = ssub.s32 256, 256
      %127 = vsyncadd [#allocation4], %s126
      %s128 = sshll.u32 [#allocation5], 4
      %s129 = int_to_ptr.vmem [resolvable:$true] %s128
      %134 = dma.vmem_to_hbm [thread:$0]  %s129, 256, %s3, [#allocation4], 128, 128, 8
    $region21: #{tpu_custom_call.1} parent=1 // pred_fallthru
      _
    // Predicated region
    $region22: #{tpu_custom_call.1} parent=1 // pred_check
      _
    $region23: #{tpu_custom_call.1} parent=1 // pred_check_branch
      %136 = sbr.rel (0) target = $region25
    $region24: #{tpu_custom_call.1} parent=1 // pred_region
      %137 = dma.done [#allocation4], 256
    $region25: #{tpu_custom_call.1} parent=1 // pred_fallthru
      _
    %138 = vsyncpa [#allocation3], 1
    %139 = vsyncpa [#allocation4], 1

</llo_original>
